<compile_context>
chip_gen: v7x
topology: tpu7x:2x2x1
jax: 0.10.0
libtpu: 0.0.40
codegen_flags: <defaults>
</compile_context>

<pallas_src>
import jax
import jax.numpy as jnp
from jax import lax
from jax.experimental import pallas as pl
from jax.experimental.pallas import tpu as pltpu


_CHUNK_R = 8  # inner-loop chunk: 8 sublanes x `lane` lanes per step

# Flat SMEM parameter layout (offsets into the (64,) f32 array).
_OFF_W1, _OFF_B1 = 0, 10     # w1: [5, 2] row-major, b1: [5]
_OFF_W2, _OFF_B2 = 15, 40    # w2: [5, 5] row-major, b2: [5]
_OFF_W3, _OFF_B3 = 45, 50    # w3: [1, 5] row-major, b3: [1]


def _round_up(x, m):
    return ((x + m - 1) // m) * m


def mlp_kernel(p_ref, x0_ref, x1_ref, o_ref):
    # p_ref : (64,) f32 in SMEM          -- weights/biases as scalars
    # x0_ref: (tile_r, lane) f32 in VMEM -- input feature 0, dense batch tile
    # x1_ref: (tile_r, lane) f32 in VMEM -- input feature 1
    # o_ref : (tile_r, lane) f32 in VMEM -- dense output tile

    # Hoist every scalar load out of the inner loop (a handful of sld's per
    # grid step; they become scalar operands of the vector MACs below).
    w1 = [[p_ref[_OFF_W1 + 2 * c + i] for i in range(2)] for c in range(5)]
    b1 = [p_ref[_OFF_B1 + c] for c in range(5)]
    w2 = [[p_ref[_OFF_W2 + 5 * c + i] for i in range(5)] for c in range(5)]
    b2 = [p_ref[_OFF_B2 + c] for c in range(5)]
    w3 = [p_ref[_OFF_W3 + i] for i in range(5)]
    b3 = p_ref[_OFF_B3]

    n_chunks = o_ref.shape[0] // _CHUNK_R  # static

    def body(r, carry):
        row = pl.multiple_of(r * _CHUNK_R, _CHUNK_R)
        x0 = x0_ref[pl.ds(row, _CHUNK_R), :]
        x1 = x1_ref[pl.ds(row, _CHUNK_R), :]

        # layer 1: h_c = tanh(w1[c,0]*x0 + w1[c,1]*x1 + b1[c])   (VPU + EUP)
        h = [jnp.tanh(x0 * w1[c][0] + x1 * w1[c][1] + b1[c]) for c in range(5)]

        # layer 2: g_c = tanh(sum_i w2[c,i]*h_i + b2[c])
        g = [jnp.tanh(h[0] * w2[c][0] + h[1] * w2[c][1] + h[2] * w2[c][2]
                      + h[3] * w2[c][3] + h[4] * w2[c][4] + b2[c])
             for c in range(5)]

        # layer 3: o = sum_i w3[i]*g_i + b3
        o = (g[0] * w3[0] + g[1] * w3[1] + g[2] * w3[2]
             + g[3] * w3[3] + g[4] * w3[4] + b3)

        o_ref[pl.ds(row, _CHUNK_R), :] = o  # dense, unmasked lane stores
        return carry

    lax.fori_loop(0, n_chunks, body, 0)


def pack_params(params):
    """Flatten PyTorch-layout (w1,b1,w2,b2,w3,b3) into a (64,) f32 SMEM array."""
    w1, b1, w2, b2, w3, b3 = params
    flat = jnp.concatenate([
        jnp.ravel(jnp.asarray(w1, jnp.float32)),   # 10 @ 0
        jnp.ravel(jnp.asarray(b1, jnp.float32)),   # 5  @ 10
        jnp.ravel(jnp.asarray(w2, jnp.float32)),   # 25 @ 15
        jnp.ravel(jnp.asarray(b2, jnp.float32)),   # 5  @ 40
        jnp.ravel(jnp.asarray(w3, jnp.float32)),   # 5  @ 45
        jnp.ravel(jnp.asarray(b3, jnp.float32)),   # 1  @ 50
    ])
    return jnp.pad(flat, (0, 64 - flat.shape[0]))


def net_forward(x, params, *, lane=512, tile_r=512):
    """x: (B, 2) float; params in PyTorch nn.Linear layout. Returns (B, 1) f32."""
    B = x.shape[0]

    # Dense batch layout: batch -> (rows, lane); lane multiple of 128,
    # rows multiple of 8 (sublane granularity) and of the grid tile.
    lane = min(_round_up(lane, 128), _round_up(max(B, 1), 128))
    rows = _round_up((B + lane - 1) // lane, _CHUNK_R)
    tile_r = _round_up(min(tile_r, rows), _CHUNK_R)
    rows = _round_up(rows, tile_r)
    bp = rows * lane

    xt = jnp.asarray(x, jnp.float32).T              # (2, B), feature-major
    if bp != B:
        xt = jnp.pad(xt, ((0, 0), (0, bp - B)))     # pad only the ragged tail
    x0 = xt[0].reshape(rows, lane)
    x1 = xt[1].reshape(rows, lane)

    out = pl.pallas_call(
        mlp_kernel,
        out_shape=jax.ShapeDtypeStruct((rows, lane), jnp.float32),
        grid=(rows // tile_r,),
        in_specs=[
            # 51 scalars -> SMEM, resident for the whole kernel.
            pl.BlockSpec(memory_space=pltpu.MemorySpace.SMEM),
            pl.BlockSpec((tile_r, lane), lambda i: (i, 0)),   # feature-0 plane
            pl.BlockSpec((tile_r, lane), lambda i: (i, 0)),   # feature-1 plane
        ],
        out_specs=pl.BlockSpec((tile_r, lane), lambda i: (i, 0)),
        compiler_params=pltpu.CompilerParams(
            dimension_semantics=("parallel",),      # 2-TC split on v7x
            vmem_limit_bytes=32 * 1024 * 1024,      # explicit headroom, fits v7x
        ),
        cost_estimate=pl.CostEstimate(
            flops=80 * bp, transcendentals=10 * bp, bytes_accessed=12 * bp),
    )(pack_params(params), x0, x1)

    return out.reshape(bp)[:B].reshape(B, 1)


def init_params(key):
    # Deterministic synthetic init, PyTorch nn.Linear shapes ([out, in] weights).
    k1, k2, k3, k4, k5, k6 = jax.random.split(key, 6)
    w1 = jax.random.normal(k1, (5, 2), jnp.float32) * 0.5   # layer1.weight
    b1 = jax.random.normal(k2, (5,), jnp.float32) * 0.1     # layer1.bias
    w2 = jax.random.normal(k3, (5, 5), jnp.float32) * 0.5   # layer2.weight
    b2 = jax.random.normal(k4, (5,), jnp.float32) * 0.1     # layer2.bias
    w3 = jax.random.normal(k5, (1, 5), jnp.float32) * 0.5   # layer3.weight
    b3 = jax.random.normal(k6, (1,), jnp.float32) * 0.1     # layer3.bias
    return w1, b1, w2, b2, w3, b3


if __name__ == "__main__":
    key = jax.random.PRNGKey(0)
    kx, kp = jax.random.split(key)
    B = 8
    x = jax.random.normal(kx, (B, 2), jnp.float32)
    params = init_params(kp)

    fwd = jax.jit(lambda xx: net_forward(xx, params))
    out = jax.block_until_ready(fwd(x))

    # Plain-JAX reference (same math as the PyTorch module).
    w1, b1, w2, b2, w3, b3 = params
    ref = jnp.tanh(x @ w1.T + b1)
    ref = jnp.tanh(ref @ w2.T + b2)
    ref = ref @ w3.T + b3

    assert out.shape == (B, 1)
    assert jnp.allclose(out, ref, atol=1e-4), "mismatch vs reference"

    print("KERNEL_OK")
</pallas_src>

<mosaic_0001>
module attributes {stable_mosaic.version = 11 : i64} {
  func.func @mlp_kernel(%arg0: i32, %arg1: memref<64xf32, #tpu.memory_space<smem>>, %arg2: memref<8x128xf32, #tpu.memory_space<vmem>>, %arg3: memref<8x128xf32, #tpu.memory_space<vmem>>, %arg4: memref<8x128xf32, #tpu.memory_space<vmem>>) attributes {dimension_semantics = [#tpu.dimension_semantics<parallel>], iteration_bounds = array<i64: 1>, scalar_prefetch = 0 : i64, scratch_operands = 0 : i64, tpu.core_type = #tpu.core_type<tc>, window_params = [{transform_indices = @transform_0, window_bounds = array<i64: 64>}, {transform_indices = @transform_1, window_bounds = array<i64: 8, 128>}, {transform_indices = @transform_2, window_bounds = array<i64: 8, 128>}, {transform_indices = @transform_3, window_bounds = array<i64: 8, 128>}]} {
    %c0 = arith.constant 0 : index
    %0 = memref.load %arg1[%c0] : memref<64xf32, #tpu.memory_space<smem>>
    %c1 = arith.constant 1 : index
    %1 = memref.load %arg1[%c1] : memref<64xf32, #tpu.memory_space<smem>>
    %c2 = arith.constant 2 : index
    %2 = memref.load %arg1[%c2] : memref<64xf32, #tpu.memory_space<smem>>
    %c3 = arith.constant 3 : index
    %3 = memref.load %arg1[%c3] : memref<64xf32, #tpu.memory_space<smem>>
    %c4 = arith.constant 4 : index
    %4 = memref.load %arg1[%c4] : memref<64xf32, #tpu.memory_space<smem>>
    %c5 = arith.constant 5 : index
    %5 = memref.load %arg1[%c5] : memref<64xf32, #tpu.memory_space<smem>>
    %c6 = arith.constant 6 : index
    %6 = memref.load %arg1[%c6] : memref<64xf32, #tpu.memory_space<smem>>
    %c7 = arith.constant 7 : index
    %7 = memref.load %arg1[%c7] : memref<64xf32, #tpu.memory_space<smem>>
    %c8 = arith.constant 8 : index
    %8 = memref.load %arg1[%c8] : memref<64xf32, #tpu.memory_space<smem>>
    %c9 = arith.constant 9 : index
    %9 = memref.load %arg1[%c9] : memref<64xf32, #tpu.memory_space<smem>>
    %c10 = arith.constant 10 : index
    %10 = memref.load %arg1[%c10] : memref<64xf32, #tpu.memory_space<smem>>
    %c11 = arith.constant 11 : index
    %11 = memref.load %arg1[%c11] : memref<64xf32, #tpu.memory_space<smem>>
    %c12 = arith.constant 12 : index
    %12 = memref.load %arg1[%c12] : memref<64xf32, #tpu.memory_space<smem>>
    %c13 = arith.constant 13 : index
    %13 = memref.load %arg1[%c13] : memref<64xf32, #tpu.memory_space<smem>>
    %c14 = arith.constant 14 : index
    %14 = memref.load %arg1[%c14] : memref<64xf32, #tpu.memory_space<smem>>
    %c15 = arith.constant 15 : index
    %15 = memref.load %arg1[%c15] : memref<64xf32, #tpu.memory_space<smem>>
    %c16 = arith.constant 16 : index
    %16 = memref.load %arg1[%c16] : memref<64xf32, #tpu.memory_space<smem>>
    %c17 = arith.constant 17 : index
    %17 = memref.load %arg1[%c17] : memref<64xf32, #tpu.memory_space<smem>>
    %c18 = arith.constant 18 : index
    %18 = memref.load %arg1[%c18] : memref<64xf32, #tpu.memory_space<smem>>
    %c19 = arith.constant 19 : index
    %19 = memref.load %arg1[%c19] : memref<64xf32, #tpu.memory_space<smem>>
    %c20 = arith.constant 20 : index
    %20 = memref.load %arg1[%c20] : memref<64xf32, #tpu.memory_space<smem>>
    %c21 = arith.constant 21 : index
    %21 = memref.load %arg1[%c21] : memref<64xf32, #tpu.memory_space<smem>>
    %c22 = arith.constant 22 : index
    %22 = memref.load %arg1[%c22] : memref<64xf32, #tpu.memory_space<smem>>
    %c23 = arith.constant 23 : index
    %23 = memref.load %arg1[%c23] : memref<64xf32, #tpu.memory_space<smem>>
    %c24 = arith.constant 24 : index
    %24 = memref.load %arg1[%c24] : memref<64xf32, #tpu.memory_space<smem>>
    %c25 = arith.constant 25 : index
    %25 = memref.load %arg1[%c25] : memref<64xf32, #tpu.memory_space<smem>>
    %c26 = arith.constant 26 : index
    %26 = memref.load %arg1[%c26] : memref<64xf32, #tpu.memory_space<smem>>
    %c27 = arith.constant 27 : index
    %27 = memref.load %arg1[%c27] : memref<64xf32, #tpu.memory_space<smem>>
    %c28 = arith.constant 28 : index
    %28 = memref.load %arg1[%c28] : memref<64xf32, #tpu.memory_space<smem>>
    %c29 = arith.constant 29 : index
    %29 = memref.load %arg1[%c29] : memref<64xf32, #tpu.memory_space<smem>>
    %c30 = arith.constant 30 : index
    %30 = memref.load %arg1[%c30] : memref<64xf32, #tpu.memory_space<smem>>
    %c31 = arith.constant 31 : index
    %31 = memref.load %arg1[%c31] : memref<64xf32, #tpu.memory_space<smem>>
    %c32 = arith.constant 32 : index
    %32 = memref.load %arg1[%c32] : memref<64xf32, #tpu.memory_space<smem>>
    %c33 = arith.constant 33 : index
    %33 = memref.load %arg1[%c33] : memref<64xf32, #tpu.memory_space<smem>>
    %c34 = arith.constant 34 : index
    %34 = memref.load %arg1[%c34] : memref<64xf32, #tpu.memory_space<smem>>
    %c35 = arith.constant 35 : index
    %35 = memref.load %arg1[%c35] : memref<64xf32, #tpu.memory_space<smem>>
    %c36 = arith.constant 36 : index
    %36 = memref.load %arg1[%c36] : memref<64xf32, #tpu.memory_space<smem>>
    %c37 = arith.constant 37 : index
    %37 = memref.load %arg1[%c37] : memref<64xf32, #tpu.memory_space<smem>>
    %c38 = arith.constant 38 : index
    %38 = memref.load %arg1[%c38] : memref<64xf32, #tpu.memory_space<smem>>
    %c39 = arith.constant 39 : index
    %39 = memref.load %arg1[%c39] : memref<64xf32, #tpu.memory_space<smem>>
    %c40 = arith.constant 40 : index
    %40 = memref.load %arg1[%c40] : memref<64xf32, #tpu.memory_space<smem>>
    %c41 = arith.constant 41 : index
    %41 = memref.load %arg1[%c41] : memref<64xf32, #tpu.memory_space<smem>>
    %c42 = arith.constant 42 : index
    %42 = memref.load %arg1[%c42] : memref<64xf32, #tpu.memory_space<smem>>
    %c43 = arith.constant 43 : index
    %43 = memref.load %arg1[%c43] : memref<64xf32, #tpu.memory_space<smem>>
    %c44 = arith.constant 44 : index
    %44 = memref.load %arg1[%c44] : memref<64xf32, #tpu.memory_space<smem>>
    %c45 = arith.constant 45 : index
    %45 = memref.load %arg1[%c45] : memref<64xf32, #tpu.memory_space<smem>>
    %c46 = arith.constant 46 : index
    %46 = memref.load %arg1[%c46] : memref<64xf32, #tpu.memory_space<smem>>
    %c47 = arith.constant 47 : index
    %47 = memref.load %arg1[%c47] : memref<64xf32, #tpu.memory_space<smem>>
    %c48 = arith.constant 48 : index
    %48 = memref.load %arg1[%c48] : memref<64xf32, #tpu.memory_space<smem>>
    %c49 = arith.constant 49 : index
    %49 = memref.load %arg1[%c49] : memref<64xf32, #tpu.memory_space<smem>>
    %c50 = arith.constant 50 : index
    %50 = memref.load %arg1[%c50] : memref<64xf32, #tpu.memory_space<smem>>
    %c0_i32 = arith.constant 0 : i32
    %c8_i32 = arith.constant 8 : i32
    %51 = arith.muli %c0_i32, %c8_i32 : i32
    %52 = tpu.assume_multiple %51, 8 : i32
    %53 = arith.index_cast %52 : i32 to index
    %c0_0 = arith.constant 0 : index
    %54 = vector.load %arg2[%53, %c0_0] : memref<8x128xf32, #tpu.memory_space<vmem>>, vector<8x128xf32>
    %55 = arith.index_cast %52 : i32 to index
    %c0_1 = arith.constant 0 : index
    %56 = vector.load %arg3[%55, %c0_1] : memref<8x128xf32, #tpu.memory_space<vmem>>, vector<8x128xf32>
    %57 = vector.broadcast %0 : f32 to vector<8x128xf32>
    %58 = arith.mulf %54, %57 : vector<8x128xf32>
    %59 = vector.broadcast %1 : f32 to vector<8x128xf32>
    %60 = arith.mulf %56, %59 : vector<8x128xf32>
    %61 = arith.addf %58, %60 : vector<8x128xf32>
    %62 = vector.broadcast %10 : f32 to vector<8x128xf32>
    %63 = arith.addf %61, %62 : vector<8x128xf32>
    %64 = math.tanh %63 : vector<8x128xf32>
    %65 = vector.broadcast %2 : f32 to vector<8x128xf32>
    %66 = arith.mulf %54, %65 : vector<8x128xf32>
    %67 = vector.broadcast %3 : f32 to vector<8x128xf32>
    %68 = arith.mulf %56, %67 : vector<8x128xf32>
    %69 = arith.addf %66, %68 : vector<8x128xf32>
    %70 = vector.broadcast %11 : f32 to vector<8x128xf32>
    %71 = arith.addf %69, %70 : vector<8x128xf32>
    %72 = math.tanh %71 : vector<8x128xf32>
    %73 = vector.broadcast %4 : f32 to vector<8x128xf32>
    %74 = arith.mulf %54, %73 : vector<8x128xf32>
    %75 = vector.broadcast %5 : f32 to vector<8x128xf32>
    %76 = arith.mulf %56, %75 : vector<8x128xf32>
    %77 = arith.addf %74, %76 : vector<8x128xf32>
    %78 = vector.broadcast %12 : f32 to vector<8x128xf32>
    %79 = arith.addf %77, %78 : vector<8x128xf32>
    %80 = math.tanh %79 : vector<8x128xf32>
    %81 = vector.broadcast %6 : f32 to vector<8x128xf32>
    %82 = arith.mulf %54, %81 : vector<8x128xf32>
    %83 = vector.broadcast %7 : f32 to vector<8x128xf32>
    %84 = arith.mulf %56, %83 : vector<8x128xf32>
    %85 = arith.addf %82, %84 : vector<8x128xf32>
    %86 = vector.broadcast %13 : f32 to vector<8x128xf32>
    %87 = arith.addf %85, %86 : vector<8x128xf32>
    %88 = math.tanh %87 : vector<8x128xf32>
    %89 = vector.broadcast %8 : f32 to vector<8x128xf32>
    %90 = arith.mulf %54, %89 : vector<8x128xf32>
    %91 = vector.broadcast %9 : f32 to vector<8x128xf32>
    %92 = arith.mulf %56, %91 : vector<8x128xf32>
    %93 = arith.addf %90, %92 : vector<8x128xf32>
    %94 = vector.broadcast %14 : f32 to vector<8x128xf32>
    %95 = arith.addf %93, %94 : vector<8x128xf32>
    %96 = math.tanh %95 : vector<8x128xf32>
    %97 = vector.broadcast %15 : f32 to vector<8x128xf32>
    %98 = arith.mulf %64, %97 : vector<8x128xf32>
    %99 = vector.broadcast %16 : f32 to vector<8x128xf32>
    %100 = arith.mulf %72, %99 : vector<8x128xf32>
    %101 = arith.addf %98, %100 : vector<8x128xf32>
    %102 = vector.broadcast %17 : f32 to vector<8x128xf32>
    %103 = arith.mulf %80, %102 : vector<8x128xf32>
    %104 = arith.addf %101, %103 : vector<8x128xf32>
    %105 = vector.broadcast %18 : f32 to vector<8x128xf32>
    %106 = arith.mulf %88, %105 : vector<8x128xf32>
    %107 = arith.addf %104, %106 : vector<8x128xf32>
    %108 = vector.broadcast %19 : f32 to vector<8x128xf32>
    %109 = arith.mulf %96, %108 : vector<8x128xf32>
    %110 = arith.addf %107, %109 : vector<8x128xf32>
    %111 = vector.broadcast %40 : f32 to vector<8x128xf32>
    %112 = arith.addf %110, %111 : vector<8x128xf32>
    %113 = math.tanh %112 : vector<8x128xf32>
    %114 = vector.broadcast %20 : f32 to vector<8x128xf32>
    %115 = arith.mulf %64, %114 : vector<8x128xf32>
    %116 = vector.broadcast %21 : f32 to vector<8x128xf32>
    %117 = arith.mulf %72, %116 : vector<8x128xf32>
    %118 = arith.addf %115, %117 : vector<8x128xf32>
    %119 = vector.broadcast %22 : f32 to vector<8x128xf32>
    %120 = arith.mulf %80, %119 : vector<8x128xf32>
    %121 = arith.addf %118, %120 : vector<8x128xf32>
    %122 = vector.broadcast %23 : f32 to vector<8x128xf32>
    %123 = arith.mulf %88, %122 : vector<8x128xf32>
    %124 = arith.addf %121, %123 : vector<8x128xf32>
    %125 = vector.broadcast %24 : f32 to vector<8x128xf32>
    %126 = arith.mulf %96, %125 : vector<8x128xf32>
    %127 = arith.addf %124, %126 : vector<8x128xf32>
    %128 = vector.broadcast %41 : f32 to vector<8x128xf32>
    %129 = arith.addf %127, %128 : vector<8x128xf32>
    %130 = math.tanh %129 : vector<8x128xf32>
    %131 = vector.broadcast %25 : f32 to vector<8x128xf32>
    %132 = arith.mulf %64, %131 : vector<8x128xf32>
    %133 = vector.broadcast %26 : f32 to vector<8x128xf32>
    %134 = arith.mulf %72, %133 : vector<8x128xf32>
    %135 = arith.addf %132, %134 : vector<8x128xf32>
    %136 = vector.broadcast %27 : f32 to vector<8x128xf32>
    %137 = arith.mulf %80, %136 : vector<8x128xf32>
    %138 = arith.addf %135, %137 : vector<8x128xf32>
    %139 = vector.broadcast %28 : f32 to vector<8x128xf32>
    %140 = arith.mulf %88, %139 : vector<8x128xf32>
    %141 = arith.addf %138, %140 : vector<8x128xf32>
    %142 = vector.broadcast %29 : f32 to vector<8x128xf32>
    %143 = arith.mulf %96, %142 : vector<8x128xf32>
    %144 = arith.addf %141, %143 : vector<8x128xf32>
    %145 = vector.broadcast %42 : f32 to vector<8x128xf32>
    %146 = arith.addf %144, %145 : vector<8x128xf32>
    %147 = math.tanh %146 : vector<8x128xf32>
    %148 = vector.broadcast %30 : f32 to vector<8x128xf32>
    %149 = arith.mulf %64, %148 : vector<8x128xf32>
    %150 = vector.broadcast %31 : f32 to vector<8x128xf32>
    %151 = arith.mulf %72, %150 : vector<8x128xf32>
    %152 = arith.addf %149, %151 : vector<8x128xf32>
    %153 = vector.broadcast %32 : f32 to vector<8x128xf32>
    %154 = arith.mulf %80, %153 : vector<8x128xf32>
    %155 = arith.addf %152, %154 : vector<8x128xf32>
    %156 = vector.broadcast %33 : f32 to vector<8x128xf32>
    %157 = arith.mulf %88, %156 : vector<8x128xf32>
    %158 = arith.addf %155, %157 : vector<8x128xf32>
    %159 = vector.broadcast %34 : f32 to vector<8x128xf32>
    %160 = arith.mulf %96, %159 : vector<8x128xf32>
    %161 = arith.addf %158, %160 : vector<8x128xf32>
    %162 = vector.broadcast %43 : f32 to vector<8x128xf32>
    %163 = arith.addf %161, %162 : vector<8x128xf32>
    %164 = math.tanh %163 : vector<8x128xf32>
    %165 = vector.broadcast %35 : f32 to vector<8x128xf32>
    %166 = arith.mulf %64, %165 : vector<8x128xf32>
    %167 = vector.broadcast %36 : f32 to vector<8x128xf32>
    %168 = arith.mulf %72, %167 : vector<8x128xf32>
    %169 = arith.addf %166, %168 : vector<8x128xf32>
    %170 = vector.broadcast %37 : f32 to vector<8x128xf32>
    %171 = arith.mulf %80, %170 : vector<8x128xf32>
    %172 = arith.addf %169, %171 : vector<8x128xf32>
    %173 = vector.broadcast %38 : f32 to vector<8x128xf32>
    %174 = arith.mulf %88, %173 : vector<8x128xf32>
    %175 = arith.addf %172, %174 : vector<8x128xf32>
    %176 = vector.broadcast %39 : f32 to vector<8x128xf32>
    %177 = arith.mulf %96, %176 : vector<8x128xf32>
    %178 = arith.addf %175, %177 : vector<8x128xf32>
    %179 = vector.broadcast %44 : f32 to vector<8x128xf32>
    %180 = arith.addf %178, %179 : vector<8x128xf32>
    %181 = math.tanh %180 : vector<8x128xf32>
    %182 = vector.broadcast %45 : f32 to vector<8x128xf32>
    %183 = arith.mulf %113, %182 : vector<8x128xf32>
    %184 = vector.broadcast %46 : f32 to vector<8x128xf32>
    %185 = arith.mulf %130, %184 : vector<8x128xf32>
    %186 = arith.addf %183, %185 : vector<8x128xf32>
    %187 = vector.broadcast %47 : f32 to vector<8x128xf32>
    %188 = arith.mulf %147, %187 : vector<8x128xf32>
    %189 = arith.addf %186, %188 : vector<8x128xf32>
    %190 = vector.broadcast %48 : f32 to vector<8x128xf32>
    %191 = arith.mulf %164, %190 : vector<8x128xf32>
    %192 = arith.addf %189, %191 : vector<8x128xf32>
    %193 = vector.broadcast %49 : f32 to vector<8x128xf32>
    %194 = arith.mulf %181, %193 : vector<8x128xf32>
    %195 = arith.addf %192, %194 : vector<8x128xf32>
    %196 = vector.broadcast %50 : f32 to vector<8x128xf32>
    %197 = arith.addf %195, %196 : vector<8x128xf32>
    %198 = arith.index_cast %52 : i32 to index
    %c0_2 = arith.constant 0 : index
    %199 = vector.load %arg4[%198, %c0_2] : memref<8x128xf32, #tpu.memory_space<vmem>>, vector<8x128xf32>
    tpu.vector_store %arg4[%198, %c0_2], %197 {strides = array<i32>} : memref<8x128xf32, #tpu.memory_space<vmem>>, vector<8x128xf32>,
    %c1_i32 = arith.constant 1 : i32
    return
  }
  func.func @transform_0(%arg0: i32) -> i32 {
    %c0_i32 = arith.constant 0 : i32
    %c0_i32_0 = arith.constant 0 : i32
    return %c0_i32 : i32
  }
  func.func @transform_1(%arg0: i32) -> (i32, i32) {
    %c0_i32 = arith.constant 0 : i32
    %c0_i32_0 = arith.constant 0 : i32
    return %arg0, %c0_i32 : i32, i32
  }
  func.func @transform_2(%arg0: i32) -> (i32, i32) {
    %c0_i32 = arith.constant 0 : i32
    %c0_i32_0 = arith.constant 0 : i32
    return %arg0, %c0_i32 : i32, i32
  }
  func.func @transform_3(%arg0: i32) -> (i32, i32) {
    %c0_i32 = arith.constant 0 : i32
    %c0_i32_0 = arith.constant 0 : i32
    return %arg0, %c0_i32 : i32, i32
  }
}

</mosaic_0001>

<llo_original>
// kernel: _lambda_.1
$region0: #{_lambda_.1}
  #allocation0 [shape = 'u32[]', space=smem, size = 0x4, offset = 0x4, fixed_abs, tag = 'smem constant byte address 0x4 - core index']
  #allocation1 [shape = 'u32[144,128]{1,0:T(1,128)}', space=vmem, size = 0x12000, scoped, tag = 'internal scratch']
  %s0 = inlined_call_operand.vmem [shape: f32[64], index: 0, kind: input, shape index: {}]
  %s1 = inlined_call_operand.vmem [shape: f32[8,128], index: 1, kind: input, shape index: {}]
  %s2 = inlined_call_operand.vmem [shape: f32[8,128], index: 2, kind: input, shape index: {}]
  %s3 = inlined_call_operand.vmem [shape: f32[8,128], index: 3, kind: output, shape index: {}]
  %s4 = sld [smem:[#allocation0]]
  $region26: #{_lambda_.1} parent=0
    _
  %s6 = ssub.s32 1, %s4
  %s7 = scalar_select 0, %s6, %s4
  $region1: #{_lambda_.1} parent=0
    #allocation2 [shape = 'u8[512]{0}', space=smem, size = 0x200, scoped, tag = 'input window, operand 0, single buffered']
    #allocation3 [shape = 's32[1]{0}', space=sflag, size = 0x4, scoped, tag = 'scoped memory for _lambda_.1']
    %8 = vsyncpa [#allocation3], 0
    // Predicated region
    $region2: #{_lambda_.1} parent=1 // pred_check
      _
    $region3: #{_lambda_.1} parent=1 // pred_check_branch
      %10 = sbr.rel (0) target = $region5
    $region4: #{_lambda_.1} parent=1 // pred_region
      %s12 = ssub.s32 16, 16
      %13 = vsyncadd [#allocation3], %s12
      %s15 = sshll.u32 %s0, 4
      %s16 = int_to_ptr.vmem [resolvable:$true] %s15
      %18 = dma.vmem_to_smem %s16, 16, [#allocation2], [#allocation3]
    $region5: #{_lambda_.1} parent=1 // pred_fallthru
      _
    // Predicated region
    $region6: #{_lambda_.1} parent=1 // pred_check
      _
    $region7: #{_lambda_.1} parent=1 // pred_check_branch
      %20 = sbr.rel (0) target = $region9
    $region8: #{_lambda_.1} parent=1 // pred_region
      _
    $region9: #{_lambda_.1} parent=1 // pred_fallthru
      _
    // Predicated region
    $region10: #{_lambda_.1} parent=1 // pred_check
      _
    $region11: #{_lambda_.1} parent=1 // pred_check_branch
      %22 = sbr.rel (0) target = $region13
    $region12: #{_lambda_.1} parent=1 // pred_region
      _
    $region13: #{_lambda_.1} parent=1 // pred_fallthru
      _
    // Predicated region
    $region14: #{_lambda_.1} parent=1 // pred_check
      _
    $region15: #{_lambda_.1} parent=1 // pred_check_branch
      %24 = sbr.rel (0) target = $region17
    $region16: #{_lambda_.1} parent=1 // pred_region
      %25 = dma.done [#allocation3], 16
    $region17: #{_lambda_.1} parent=1 // pred_fallthru
      _
    %26 = sfence
    %s27 = sld [smem:[#allocation2]]
    %s28 = sld [smem:[#allocation2 + $0x1]]
    %s29 = sld [smem:[#allocation2 + $0x2]]
    %s30 = sld [smem:[#allocation2 + $0x3]]
    %s31 = sld [smem:[#allocation2 + $0x4]]
    %s32 = sld [smem:[#allocation2 + $0x5]]
    %s33 = sld [smem:[#allocation2 + $0x6]]
    %s34 = sld [smem:[#allocation2 + $0x7]]
    %s35 = sld [smem:[#allocation2 + $0x8]]
    %s36 = sld [smem:[#allocation2 + $0x9]]
    %s37 = sld [smem:[#allocation2 + $0xa]]
    %s38 = sld [smem:[#allocation2 + $0xb]]
    %s39 = sld [smem:[#allocation2 + $0xc]]
    %s40 = sld [smem:[#allocation2 + $0xd]]
    %s41 = sld [smem:[#allocation2 + $0xe]]
    %s42 = sld [smem:[#allocation2 + $0xf]]
    %s43 = sld [smem:[#allocation2 + $0x10]]
    %s44 = sld [smem:[#allocation2 + $0x11]]
    %s45 = sld [smem:[#allocation2 + $0x12]]
    %s46 = sld [smem:[#allocation2 + $0x13]]
    %s47 = sld [smem:[#allocation2 + $0x14]]
    %s48 = sld [smem:[#allocation2 + $0x15]]
    %s49 = sld [smem:[#allocation2 + $0x16]]
    %s50 = sld [smem:[#allocation2 + $0x17]]
    %s51 = sld [smem:[#allocation2 + $0x18]]
    %s52 = sld [smem:[#allocation2 + $0x19]]
    %s53 = sld [smem:[#allocation2 + $0x1a]]
    %s54 = sld [smem:[#allocation2 + $0x1b]]
    %s55 = sld [smem:[#allocation2 + $0x1c]]
    %s56 = sld [smem:[#allocation2 + $0x1d]]
    %s57 = sld [smem:[#allocation2 + $0x1e]]
    %s58 = sld [smem:[#allocation2 + $0x1f]]
    %s59 = sld [smem:[#allocation2 + $0x20]]
    %s60 = sld [smem:[#allocation2 + $0x21]]
    %s61 = sld [smem:[#allocation2 + $0x22]]
    %s62 = sld [smem:[#allocation2 + $0x23]]
    %s63 = sld [smem:[#allocation2 + $0x24]]
    %s64 = sld [smem:[#allocation2 + $0x25]]
    %s65 = sld [smem:[#allocation2 + $0x26]]
    %s66 = sld [smem:[#allocation2 + $0x27]]
    %s67 = sld [smem:[#allocation2 + $0x28]]
    %s68 = sld [smem:[#allocation2 + $0x29]]
    %s69 = sld [smem:[#allocation2 + $0x2a]]
    %s70 = sld [smem:[#allocation2 + $0x2b]]
    %s71 = sld [smem:[#allocation2 + $0x2c]]
    %s72 = sld [smem:[#allocation2 + $0x2d]]
    %s73 = sld [smem:[#allocation2 + $0x2e]]
    %s74 = sld [smem:[#allocation2 + $0x2f]]
    %s75 = sld [smem:[#allocation2 + $0x30]]
    %s76 = sld [smem:[#allocation2 + $0x31]]
    %s77 = sld [smem:[#allocation2 + $0x32]]
    %v78 = vld [vmem:[%s1] sm:$0xff]
    %v79 = vld [vmem:[%s2] sm:$0xff]
    %v80 = vstv %s27
    %v81 = vmul.f32 %v78, %v80
    %v82 = vstv %s28
    %v83 = vmul.f32 %v79, %v82
    %v84 = vadd.f32 %v81, %v83
    %v85 = vstv %s37
    %v86 = vadd.f32 %v84, %v85
    %v87 = vtanh.pop %v86
    %v88 = vstv %s29
    %v89 = vmul.f32 %v78, %v88
    %v90 = vstv %s30
    %v91 = vmul.f32 %v79, %v90
    %v92 = vadd.f32 %v89, %v91
    %v93 = vstv %s38
    %v94 = vadd.f32 %v92, %v93
    %v95 = vtanh.pop %v94
    %v96 = vstv %s31
    %v97 = vmul.f32 %v78, %v96
    %v98 = vstv %s32
    %v99 = vmul.f32 %v79, %v98
    %v100 = vadd.f32 %v97, %v99
    %v101 = vstv %s39
    %v102 = vadd.f32 %v100, %v101
    %v103 = vtanh.pop %v102
    %v104 = vstv %s33
    %v105 = vmul.f32 %v78, %v104
    %v106 = vstv %s34
    %v107 = vmul.f32 %v79, %v106
    %v108 = vadd.f32 %v105, %v107
    %v109 = vstv %s40
    %v110 = vadd.f32 %v108, %v109
    %v111 = vtanh.pop %v110
    %v112 = vstv %s35
    %v113 = vmul.f32 %v78, %v112
    %v114 = vstv %s36
    %v115 = vmul.f32 %v79, %v114
    %v116 = vadd.f32 %v113, %v115
    %v117 = vstv %s41
    %v118 = vadd.f32 %v116, %v117
    %v119 = vtanh.pop %v118
    %v120 = vstv %s42
    %v121 = vmul.f32 %v87, %v120
    %v122 = vstv %s43
    %v123 = vmul.f32 %v95, %v122
    %v124 = vadd.f32 %v121, %v123
    %v125 = vstv %s44
    %v126 = vmul.f32 %v103, %v125
    %v127 = vadd.f32 %v124, %v126
    %v128 = vstv %s45
    %v129 = vmul.f32 %v111, %v128
    %v130 = vadd.f32 %v127, %v129
    %v131 = vstv %s46
    %v132 = vmul.f32 %v119, %v131
    %v133 = vadd.f32 %v130, %v132
    %v134 = vstv %s67
    %v135 = vadd.f32 %v133, %v134
    %v136 = vtanh.pop %v135
    %v137 = vstv %s47
    %v138 = vmul.f32 %v87, %v137
    %v139 = vstv %s48
    %v140 = vmul.f32 %v95, %v139
    %v141 = vadd.f32 %v138, %v140
    %v142 = vstv %s49
    %v143 = vmul.f32 %v103, %v142
    %v144 = vadd.f32 %v141, %v143
    %v145 = vstv %s50
    %v146 = vmul.f32 %v111, %v145
    %v147 = vadd.f32 %v144, %v146
    %v148 = vstv %s51
    %v149 = vmul.f32 %v119, %v148
    %v150 = vadd.f32 %v147, %v149
    %v151 = vstv %s68
    %v152 = vadd.f32 %v150, %v151
    %v153 = vtanh.pop %v152
    %v154 = vstv %s52
    %v155 = vmul.f32 %v87, %v154
    %v156 = vstv %s53
    %v157 = vmul.f32 %v95, %v156
    %v158 = vadd.f32 %v155, %v157
    %v159 = vstv %s54
    %v160 = vmul.f32 %v103, %v159
    %v161 = vadd.f32 %v158, %v160
    %v162 = vstv %s55
    %v163 = vmul.f32 %v111, %v162
    %v164 = vadd.f32 %v161, %v163
    %v165 = vstv %s56
    %v166 = vmul.f32 %v119, %v165
    %v167 = vadd.f32 %v164, %v166
    %v168 = vstv %s69
    %v169 = vadd.f32 %v167, %v168
    %v170 = vtanh.pop %v169
    %v171 = vstv %s57
    %v172 = vmul.f32 %v87, %v171
    %v173 = vstv %s58
    %v174 = vmul.f32 %v95, %v173
    %v175 = vadd.f32 %v172, %v174
    %v176 = vstv %s59
    %v177 = vmul.f32 %v103, %v176
    %v178 = vadd.f32 %v175, %v177
    %v179 = vstv %s60
    %v180 = vmul.f32 %v111, %v179
    %v181 = vadd.f32 %v178, %v180
    %v182 = vstv %s61
    %v183 = vmul.f32 %v119, %v182
    %v184 = vadd.f32 %v181, %v183
    %v185 = vstv %s70
    %v186 = vadd.f32 %v184, %v185
    %v187 = vtanh.pop %v186
    %v188 = vstv %s62
    %v189 = vmul.f32 %v87, %v188
    %v190 = vstv %s63
    %v191 = vmul.f32 %v95, %v190
    %v192 = vadd.f32 %v189, %v191
    %v193 = vstv %s64
    %v194 = vmul.f32 %v103, %v193
    %v195 = vadd.f32 %v192, %v194
    %v196 = vstv %s65
    %v197 = vmul.f32 %v111, %v196
    %v198 = vadd.f32 %v195, %v197
    %v199 = vstv %s66
    %v200 = vmul.f32 %v119, %v199
    %v201 = vadd.f32 %v198, %v200
    %v202 = vstv %s71
    %v203 = vadd.f32 %v201, %v202
    %v204 = vtanh.pop %v203
    %v205 = vstv %s72
    %v206 = vmul.f32 %v136, %v205
    %v207 = vstv %s73
    %v208 = vmul.f32 %v153, %v207
    %v209 = vadd.f32 %v206, %v208
    %v210 = vstv %s74
    %v211 = vmul.f32 %v170, %v210
    %v212 = vadd.f32 %v209, %v211
    %v213 = vstv %s75
    %v214 = vmul.f32 %v187, %v213
    %v215 = vadd.f32 %v212, %v214
    %v216 = vstv %s76
    %v217 = vmul.f32 %v204, %v216
    %v218 = vadd.f32 %v215, %v217
    %v219 = vstv %s77
    %v220 = vadd.f32 %v218, %v219
    %221 = vst [vmem:[%s3] sm:$0xff] %v220
    // Predicated region
    $region18: #{_lambda_.1} parent=1 // pred_check
      _
    $region19: #{_lambda_.1} parent=1 // pred_check_branch
      %223 = sbr.rel (0) target = $region21
    $region20: #{_lambda_.1} parent=1 // pred_region
      _
    $region21: #{_lambda_.1} parent=1 // pred_fallthru
      _
    // Predicated region
    $region22: #{_lambda_.1} parent=1 // pred_check
      _
    $region23: #{_lambda_.1} parent=1 // pred_check_branch
      %225 = sbr.rel (0) target = $region25
    $region24: #{_lambda_.1} parent=1 // pred_region
      _
    $region25: #{_lambda_.1} parent=1 // pred_fallthru
      _
    %226 = vsyncpa [#allocation3], 1

</llo_original>
